<compile_context>
chip_gen: v5e
topology: v5e:2x2
jax: 0.10.0
libtpu: 0.0.40
codegen_flags: <defaults>
</compile_context>

<pallas_src>
import functools

import jax
import jax.numpy as jnp
from jax.experimental import pallas as pl
from jax.experimental.pallas import tpu as pltpu


def _maxpool_kernel(w_ref, o_ref, *, n_win: int):
    # w_ref: (n_win, TR, LANES) window slices, o_ref: (TR, LANES).
    # Pure VPU: chained elementwise max over the (static) window positions.
    y = w_ref[0]
    for i in range(1, n_win):
        y = jnp.maximum(y, w_ref[i])
    o_ref[...] = y


def _round_up(a, b):
    return (a + b - 1) // b * b


def maxpool2d(x, *, kernel_size=2, stride=2, padding=0, reshape=False):
    """Forward pass of Maxpool2d. x: (N, C, H, W), returns NCHW (or flattened)."""
    N, C, H, W = x.shape
    KH = KW = int(kernel_size)
    s = int(stride)
    p = int(padding)
    OH = (H + 2 * p - KH) // s + 1
    OW = (W + 2 * p - KW) // s + 1
    KK = KH * KW

    xf = x.astype(jnp.float32)
    if p > 0:
        # MaxPool2d padding semantics: padded values never win the max.
        xf = jnp.pad(xf, ((0, 0), (0, 0), (p, p), (p, p)),
                     constant_values=-jnp.inf)

    # Window decomposition (plain JAX, strided slices; no transposes):
    # win[kh*KW + kw, n, c, oh, ow] = x_pad[n, c, s*oh + kh, s*ow + kw]
    slices = []
    for kh in range(KH):
        for kw in range(KW):
            slices.append(
                xf[:, :, kh:kh + s * (OH - 1) + 1:s, kw:kw + s * (OW - 1) + 1:s])
    win = jnp.stack(slices, axis=0)                      # (KK, N, C, OH, OW)

    # Flatten the output index space into a lane-dense (rows, 1024) slab.
    M = N * C * OH * OW
    LANES = 1024                                         # multiple of 128
    R = pl.cdiv(M, LANES)
    TR = min(256, _round_up(R, 8))                       # row-tile (mult. of 8)
    Rp = _round_up(R, TR)                                # grid divides evenly
    Mp = Rp * LANES

    win = win.reshape(KK, M)
    if Mp != M:
        win = jnp.pad(win, ((0, 0), (0, Mp - M)))
    win = win.reshape(KK, Rp, LANES)

    kernel = functools.partial(_maxpool_kernel, n_win=KK)
    y = pl.pallas_call(
        kernel,
        out_shape=jax.ShapeDtypeStruct((Rp, LANES), jnp.float32),
        grid_spec=pltpu.PrefetchScalarGridSpec(
            num_scalar_prefetch=0,
            grid=(Rp // TR,),
            in_specs=[pl.BlockSpec((KK, TR, LANES), lambda r: (0, r, 0))],
            out_specs=pl.BlockSpec((TR, LANES), lambda r: (r, 0)),
        ),
        compiler_params=pltpu.CompilerParams(
            dimension_semantics=("parallel",)),
        cost_estimate=pl.CostEstimate(
            flops=KK * Mp,
            transcendentals=0,
            bytes_accessed=4 * (KK * Mp + Mp)),
    )(win)

    out = y.reshape(-1)[:M].reshape(N, C, OH, OW).astype(x.dtype)
    if reshape:
        out = out.reshape(N, -1)
    return out


def _reference(x, *, kernel_size=2, stride=2, padding=0, reshape=False):
    y = jax.lax.reduce_window(
        x, -jnp.inf, jax.lax.max,
        window_dimensions=(1, 1, kernel_size, kernel_size),
        window_strides=(1, 1, stride, stride),
        padding=((0, 0), (0, 0), (padding, padding), (padding, padding)))
    if reshape:
        y = y.reshape(y.shape[0], -1)
    return y


if __name__ == "__main__":
    # Small shapes consistent with the module: N=2, C=4, H=W=16; 2x2/stride-2 pool.
    N, C, H, W = 2, 4, 16, 16
    kernel_size, stride, padding = 2, 2, 0

    key = jax.random.PRNGKey(0)
    x = jax.random.normal(key, (N, C, H, W), dtype=jnp.float32)

    out = maxpool2d(x, kernel_size=kernel_size, stride=stride,
                    padding=padding, reshape=False)
    out = jax.block_until_ready(out)

    ref = _reference(x, kernel_size=kernel_size, stride=stride,
                     padding=padding, reshape=False)
    assert out.shape == (N, C, H // 2, W // 2), out.shape
    assert jnp.allclose(out, ref), float(jnp.max(jnp.abs(out - ref)))

    # Also exercise the reshape=True path (flatten like x.view(N, -1)).
    out_flat = jax.block_until_ready(
        maxpool2d(x, kernel_size=kernel_size, stride=stride,
                  padding=padding, reshape=True))
    ref_flat = _reference(x, kernel_size=kernel_size, stride=stride,
                          padding=padding, reshape=True)
    assert out_flat.shape == (N, C * (H // 2) * (W // 2)), out_flat.shape
    assert jnp.allclose(out_flat, ref_flat)

    print("KERNEL_OK")
</pallas_src>

<mosaic_0001>
module attributes {stable_mosaic.version = 11 : i64} {
  func.func @_maxpool_kernel(%arg0: i32, %arg1: memref<4x8x1024xf32, #tpu.memory_space<vmem>>, %arg2: memref<8x1024xf32, #tpu.memory_space<vmem>>) attributes {dimension_semantics = [#tpu.dimension_semantics<parallel>], iteration_bounds = array<i64: 1>, scalar_prefetch = 0 : i64, scratch_operands = 0 : i64, tpu.core_type = #tpu.core_type<tc>, window_params = [{transform_indices = @transform_0, window_bounds = array<i64: 4, 8, 1024>}, {transform_indices = @transform_1, window_bounds = array<i64: 8, 1024>}]} {
    %c0 = arith.constant 0 : index
    %c0_0 = arith.constant 0 : index
    %c0_1 = arith.constant 0 : index
    %0 = vector.load %arg1[%c0, %c0_0, %c0_1] : memref<4x8x1024xf32, #tpu.memory_space<vmem>>, vector<1x8x1024xf32>
    %1 = vector.shape_cast %0 : vector<1x8x1024xf32> to vector<8x1024xf32>
    %c1 = arith.constant 1 : index
    %c0_2 = arith.constant 0 : index
    %c0_3 = arith.constant 0 : index
    %2 = vector.load %arg1[%c1, %c0_2, %c0_3] : memref<4x8x1024xf32, #tpu.memory_space<vmem>>, vector<1x8x1024xf32>
    %3 = vector.shape_cast %2 : vector<1x8x1024xf32> to vector<8x1024xf32>
    %4 = arith.maximumf %1, %3 : vector<8x1024xf32>
    %c2 = arith.constant 2 : index
    %c0_4 = arith.constant 0 : index
    %c0_5 = arith.constant 0 : index
    %5 = vector.load %arg1[%c2, %c0_4, %c0_5] : memref<4x8x1024xf32, #tpu.memory_space<vmem>>, vector<1x8x1024xf32>
    %6 = vector.shape_cast %5 : vector<1x8x1024xf32> to vector<8x1024xf32>
    %7 = arith.maximumf %4, %6 : vector<8x1024xf32>
    %c3 = arith.constant 3 : index
    %c0_6 = arith.constant 0 : index
    %c0_7 = arith.constant 0 : index
    %8 = vector.load %arg1[%c3, %c0_6, %c0_7] : memref<4x8x1024xf32, #tpu.memory_space<vmem>>, vector<1x8x1024xf32>
    %9 = vector.shape_cast %8 : vector<1x8x1024xf32> to vector<8x1024xf32>
    %10 = arith.maximumf %7, %9 : vector<8x1024xf32>
    %c0_8 = arith.constant 0 : index
    %c0_9 = arith.constant 0 : index
    %11 = vector.load %arg2[%c0_8, %c0_9] : memref<8x1024xf32, #tpu.memory_space<vmem>>, vector<8x1024xf32>
    tpu.vector_store %arg2[%c0_8, %c0_9], %10 {strides = array<i32>} : memref<8x1024xf32, #tpu.memory_space<vmem>>, vector<8x1024xf32>,
    return
  }
  func.func @transform_0(%arg0: i32) -> (i32, i32, i32) {
    %c0_i32 = arith.constant 0 : i32
    %c0_i32_0 = arith.constant 0 : i32
    %c0_i32_1 = arith.constant 0 : i32
    return %c0_i32, %arg0, %c0_i32_0 : i32, i32, i32
  }
  func.func @transform_1(%arg0: i32) -> (i32, i32) {
    %c0_i32 = arith.constant 0 : i32
    %c0_i32_0 = arith.constant 0 : i32
    return %arg0, %c0_i32 : i32, i32
  }
}

</mosaic_0001>

<llo_original>
// kernel: tpu_custom_call.1
$region0: #{tpu_custom_call.1}
  #allocation0 [shape = 'u32[]', space=smem, size = 0x4, offset = 0x4, fixed_abs, tag = 'smem constant byte address 0x4 - core index']
  #allocation1 [shape = 'u32[72,128]{1,0:T(1,128)}', space=vmem, size = 0x9000, scoped, tag = 'internal scratch']
  %s0 = inlined_call_operand.hbm [shape: f32[4,8,1024], index: 0, kind: input, shape index: {}]
  %s1 = inlined_call_operand.hbm [shape: f32[8,1024], index: 1, kind: output, shape index: {}]
  %s2 = sld [smem:[#allocation0]]
  $region18: #{tpu_custom_call.1} parent=0
    _
  %s4 = ssub.s32 1, %s2
  %s5 = scalar_select 0, %s4, %s2
  $region1: #{tpu_custom_call.1} parent=0
    #allocation2 [shape = 'u8[131072]{0}', space=vmem, size = 0x20000, scoped, tag = 'input window, operand 0, single buffered']
    #allocation3 [shape = 's32[1]{0}', space=sflag, size = 0x4, scoped, tag = 'scoped memory for tpu_custom_call.1']
    #allocation4 [shape = 's32[1]{0}', space=sflag, size = 0x4, scoped, tag = 'scoped memory for tpu_custom_call.1']
    #allocation5 [shape = 'u8[32768]{0}', space=vmem, size = 0x8000, scoped, tag = 'output window, operand 0, single buffered']
    %6 = vsyncpa [#allocation3], 0
    %7 = vsyncpa [#allocation4], 0
    // Predicated region
    $region2: #{tpu_custom_call.1} parent=1 // pred_check
      _
    $region3: #{tpu_custom_call.1} parent=1 // pred_check_branch
      %9 = sbr.rel (0) target = $region5
    $region4: #{tpu_custom_call.1} parent=1 // pred_region
      %11 = vsyncadd [#allocation3], 0
      %s12 = sshll.u32 %s0, 4
      %s13 = int_to_ptr.hbm [resolvable:$true] %s12
      %s14 = sshll.u32 [#allocation2], 4
      %s15 = int_to_ptr.vmem [resolvable:$true] %s14
      %20 = dma.hbm_to_vmem [thread:$0]  %s13, 4096, %s15, [#allocation3], 1024, 1024, 64
    $region5: #{tpu_custom_call.1} parent=1 // pred_fallthru
      _
    // Predicated region
    $region6: #{tpu_custom_call.1} parent=1 // pred_check
      _
    $region7: #{tpu_custom_call.1} parent=1 // pred_check_branch
      %22 = sbr.rel (0) target = $region9
    $region8: #{tpu_custom_call.1} parent=1 // pred_region
      %24 = dma.done [#allocation3], 4096
    $region9: #{tpu_custom_call.1} parent=1 // pred_fallthru
      _
    %v25 = vld [vmem:[#allocation2] sm:$0xff]
    %v26 = vld [vmem:[#allocation2 + $0x8] sm:$0xff]
    %v27 = vld [vmem:[#allocation2 + $0x10] sm:$0xff]
    %v28 = vld [vmem:[#allocation2 + $0x18] sm:$0xff]
    %v29 = vld [vmem:[#allocation2 + $0x20] sm:$0xff]
    %v30 = vld [vmem:[#allocation2 + $0x28] sm:$0xff]
    %v31 = vld [vmem:[#allocation2 + $0x30] sm:$0xff]
    %v32 = vld [vmem:[#allocation2 + $0x38] sm:$0xff]
    %s33 = scalar_lea.vmem [#allocation2], 64
    %v34 = vld [vmem:[%s33] sm:$0xff]
    %v35 = vld [vmem:[%s33 + $0x8] sm:$0xff]
    %v36 = vld [vmem:[%s33 + $0x10] sm:$0xff]
    %v37 = vld [vmem:[%s33 + $0x18] sm:$0xff]
    %v38 = vld [vmem:[%s33 + $0x20] sm:$0xff]
    %v39 = vld [vmem:[%s33 + $0x28] sm:$0xff]
    %v40 = vld [vmem:[%s33 + $0x30] sm:$0xff]
    %v41 = vld [vmem:[%s33 + $0x38] sm:$0xff]
    %v42 = vmax.f32 %v25, %v34
    %v43 = vmax.f32 %v26, %v35
    %v44 = vmax.f32 %v27, %v36
    %v45 = vmax.f32 %v28, %v37
    %v46 = vmax.f32 %v29, %v38
    %v47 = vmax.f32 %v30, %v39
    %v48 = vmax.f32 %v31, %v40
    %v49 = vmax.f32 %v32, %v41
    %s50 = scalar_lea.vmem [#allocation2], 128
    %v51 = vld [vmem:[%s50] sm:$0xff]
    %v52 = vld [vmem:[%s50 + $0x8] sm:$0xff]
    %v53 = vld [vmem:[%s50 + $0x10] sm:$0xff]
    %v54 = vld [vmem:[%s50 + $0x18] sm:$0xff]
    %v55 = vld [vmem:[%s50 + $0x20] sm:$0xff]
    %v56 = vld [vmem:[%s50 + $0x28] sm:$0xff]
    %v57 = vld [vmem:[%s50 + $0x30] sm:$0xff]
    %v58 = vld [vmem:[%s50 + $0x38] sm:$0xff]
    %v59 = vmax.f32 %v42, %v51
    %v60 = vmax.f32 %v43, %v52
    %v61 = vmax.f32 %v44, %v53
    %v62 = vmax.f32 %v45, %v54
    %v63 = vmax.f32 %v46, %v55
    %v64 = vmax.f32 %v47, %v56
    %v65 = vmax.f32 %v48, %v57
    %v66 = vmax.f32 %v49, %v58
    %s67 = scalar_lea.vmem [#allocation2], 192
    %v68 = vld [vmem:[%s67] sm:$0xff]
    %v69 = vld [vmem:[%s67 + $0x8] sm:$0xff]
    %v70 = vld [vmem:[%s67 + $0x10] sm:$0xff]
    %v71 = vld [vmem:[%s67 + $0x18] sm:$0xff]
    %v72 = vld [vmem:[%s67 + $0x20] sm:$0xff]
    %v73 = vld [vmem:[%s67 + $0x28] sm:$0xff]
    %v74 = vld [vmem:[%s67 + $0x30] sm:$0xff]
    %v75 = vld [vmem:[%s67 + $0x38] sm:$0xff]
    %v76 = vmax.f32 %v59, %v68
    %v77 = vmax.f32 %v60, %v69
    %v78 = vmax.f32 %v61, %v70
    %v79 = vmax.f32 %v62, %v71
    %v80 = vmax.f32 %v63, %v72
    %v81 = vmax.f32 %v64, %v73
    %v82 = vmax.f32 %v65, %v74
    %v83 = vmax.f32 %v66, %v75
    %84 = vst [vmem:[#allocation5] sm:$0xff] %v76
    %85 = vst [vmem:[#allocation5 + $0x8] sm:$0xff] %v77
    %86 = vst [vmem:[#allocation5 + $0x10] sm:$0xff] %v78
    %87 = vst [vmem:[#allocation5 + $0x18] sm:$0xff] %v79
    %88 = vst [vmem:[#allocation5 + $0x20] sm:$0xff] %v80
    %89 = vst [vmem:[#allocation5 + $0x28] sm:$0xff] %v81
    %90 = vst [vmem:[#allocation5 + $0x30] sm:$0xff] %v82
    %91 = vst [vmem:[#allocation5 + $0x38] sm:$0xff] %v83
    // Predicated region
    $region10: #{tpu_custom_call.1} parent=1 // pred_check
      _
    $region11: #{tpu_custom_call.1} parent=1 // pred_check_branch
      %93 = sbr.rel (0) target = $region13
    $region12: #{tpu_custom_call.1} parent=1 // pred_region
      %95 = vsyncadd [#allocation4], 0
      %s97 = sshll.u32 [#allocation5], 4
      %s98 = int_to_ptr.vmem [resolvable:$true] %s97
      %s99 = sshll.u32 %s1, 4
      %s100 = int_to_ptr.hbm [resolvable:$true] %s99
      %102 = dma.vmem_to_hbm [thread:$0]  %s98, 1024, %s100, [#allocation4]
    $region13: #{tpu_custom_call.1} parent=1 // pred_fallthru
      _
    // Predicated region
    $region14: #{tpu_custom_call.1} parent=1 // pred_check
      _
    $region15: #{tpu_custom_call.1} parent=1 // pred_check_branch
      %104 = sbr.rel (0) target = $region17
    $region16: #{tpu_custom_call.1} parent=1 // pred_region
      %106 = dma.done [#allocation4], 1024
    $region17: #{tpu_custom_call.1} parent=1 // pred_fallthru
      _
    %107 = vsyncpa [#allocation3], 1
    %108 = vsyncpa [#allocation4], 1

</llo_original>
